<compile_context>
chip_gen: v7x
topology: tpu7x:2x2x1
jax: 0.10.0
libtpu: 0.0.40
codegen_flags: <defaults>
</compile_context>

<pallas_src>
import math
from functools import partial

import jax
import jax.numpy as jnp
from jax import lax
from jax.experimental import pallas as pl
from jax.experimental.pallas import tpu as pltpu


def _round_up(a, m):
    return ((a + m - 1) // m) * m


def _sublane(dtype):
    return 8 if jnp.dtype(dtype).itemsize >= 4 else 16


def _vmem_limit(est_bytes):
    # Floor at the v6e/v7x default scoped limit (32 MiB), cap well under v7x's
    # 64 MiB physical VMEM.  Also lifts v5e above its 16 MiB default.
    return int(min(max(2 * est_bytes, 32 << 20), 44 << 20))


_VMEM_TILE_CAP = 40 << 20


# --------------------- Kernel 1: LayerNorm + QKV projection -------------------
def _ln_qkv_kernel(x_ref, g_ref, wq_ref, wkv_ref, q_ref, kv_ref, *, eps, stable):
    x = x_ref[...].astype(jnp.float32)
    if stable:
        # matches torch: x / x.amax(dim=-1, keepdim=True)
        x = x / jnp.max(x, axis=-1, keepdims=True)
    mean = jnp.mean(x, axis=-1, keepdims=True)
    xc = x - mean
    var = jnp.mean(xc * xc, axis=-1, keepdims=True)          # two-pass variance
    xn = xc * lax.rsqrt(var + eps) * g_ref[...].astype(jnp.float32)
    xn = xn.astype(x_ref.dtype)                              # MXU operands in input dtype
    q_ref[...] = jnp.dot(xn, wq_ref[...],
                         preferred_element_type=jnp.float32).astype(q_ref.dtype)
    kv_ref[...] = jnp.dot(xn, wkv_ref[...],
                          preferred_element_type=jnp.float32).astype(kv_ref.dtype)


def ln_qkv_proj(x2d, g, w_q, w_kv, *, eps, stable=False, row_tile=512):
    rows, dim = x2d.shape
    inner = w_q.shape[1]
    two_dh = w_kv.shape[1]
    itemsize = x2d.dtype.itemsize
    wsize = w_q.dtype.itemsize
    sub = _sublane(x2d.dtype)

    tm = max(sub, (row_tile // sub) * sub)
    tm = min(tm, _round_up(rows, sub))

    def est(t):
        return (2 * t * (dim + inner + two_dh) * itemsize      # double-buffered x/q/kv tiles
                + 2 * dim * (inner + two_dh) * wsize            # resident weights (2 buffers)
                + t * (dim + inner + two_dh) * 4)               # f32 temporaries

    while tm > sub and est(tm) > _VMEM_TILE_CAP:
        tm = max(sub, ((tm // 2) // sub) * sub)

    kernel = partial(_ln_qkv_kernel, eps=eps, stable=stable)
    return pl.pallas_call(
        kernel,
        out_shape=(jax.ShapeDtypeStruct((rows, inner), x2d.dtype),
                   jax.ShapeDtypeStruct((rows, two_dh), x2d.dtype)),
        grid=(pl.cdiv(rows, tm),),
        in_specs=[
            pl.BlockSpec((tm, dim), lambda i: (i, 0)),
            pl.BlockSpec((1, dim), lambda i: (0, 0)),
            pl.BlockSpec((dim, inner), lambda i: (0, 0)),
            pl.BlockSpec((dim, two_dh), lambda i: (0, 0)),
        ],
        out_specs=(pl.BlockSpec((tm, inner), lambda i: (i, 0)),
                   pl.BlockSpec((tm, two_dh), lambda i: (i, 0))),
        compiler_params=pltpu.CompilerParams(
            dimension_semantics=("parallel",),
            vmem_limit_bytes=_vmem_limit(est(tm)),
        ),
    )(x2d, g.reshape(1, dim), w_q, w_kv)


# --------------------- Kernel 2: attention core (q-tiled) ---------------------
def _attn_kernel(q_ref, kv_ref, nkv_ref, o_ref, *, heads, dim_head, cosine_sim,
                 scale, causal):
    tq = q_ref.shape[1]
    n = kv_ref.shape[1]
    sqrt_scale = math.sqrt(scale)
    eps_sq = 1e-24                                  # F.normalize eps=1e-12, squared

    kvb = kv_ref[0].astype(jnp.float32)             # (n, 2*dh)
    k = kvb[:, :dim_head]                           # (n, dh)
    v = kvb[:, dim_head:]                           # (n, dh)
    nk = nkv_ref[0:1, :].astype(jnp.float32)        # (1, dh)
    nv = nkv_ref[1:2, :].astype(jnp.float32)        # (1, dh)

    if cosine_sim:
        k = k * lax.rsqrt(jnp.maximum(jnp.sum(k * k, -1, keepdims=True), eps_sq))
        nk = nk * lax.rsqrt(jnp.maximum(jnp.sum(nk * nk, -1, keepdims=True), eps_sq))
    k = (k * sqrt_scale).astype(kv_ref.dtype)
    v = v.astype(kv_ref.dtype)
    nk = nk * sqrt_scale

    if causal:
        q_pos = pl.program_id(1) * tq + lax.broadcasted_iota(jnp.int32, (tq, n), 0)
        k_pos = lax.broadcasted_iota(jnp.int32, (tq, n), 1)
        causal_mask = k_pos > q_pos                 # null column (index 0) never masked
        neg = jnp.float32(-jnp.finfo(jnp.float32).max)

    q_all = q_ref[0]                                # (tq, h*dh), input dtype
    outs = []
    for h in range(heads):
        qh = q_all[:, h * dim_head:(h + 1) * dim_head].astype(jnp.float32)
        if cosine_sim:
            # wrapper-level `q * scale` is exactly cancelled by l2norm -> skipped
            qh = qh * lax.rsqrt(jnp.maximum(jnp.sum(qh * qh, -1, keepdims=True), eps_sq))
            qh = qh * sqrt_scale
        else:
            qh = qh * (scale * sqrt_scale)
        sim_null = jnp.sum(qh * nk, axis=-1, keepdims=True)          # (tq, 1) f32
        qh = qh.astype(q_ref.dtype)

        sim = lax.dot_general(qh, k, (((1,), (1,)), ((), ())),
                              preferred_element_type=jnp.float32)    # (tq, n) f32
        if causal:
            sim = jnp.where(causal_mask, neg, sim)

        # f32 softmax with the null column handled analytically
        m = jnp.maximum(jnp.max(sim, axis=-1, keepdims=True), sim_null)
        p = jnp.exp(sim - m)
        p_null = jnp.exp(sim_null - m)
        inv = pl.reciprocal(jnp.sum(p, axis=-1, keepdims=True) + p_null, approx=True)
        attn = (p * inv).astype(kv_ref.dtype)       # matches attn.type(sim.dtype)

        out_h = lax.dot_general(attn, v, (((1,), (0,)), ((), ())),
                                preferred_element_type=jnp.float32)  # (tq, dh)
        out_h = out_h + (p_null * inv) * nv         # null value contribution
        outs.append(out_h)

    # single lane-dense store of all heads -> output already (b, n, h*d)
    o_ref[0] = jnp.concatenate(outs, axis=-1).astype(o_ref.dtype)


def attention_core(q, kv, null_kv, *, heads, dim_head, cosine_sim, scale,
                   causal, q_tile=256):
    b, n, inner = q.shape
    two_dh = kv.shape[-1]
    itemsize = q.dtype.itemsize
    sub = _sublane(q.dtype)

    tq = max(sub, (q_tile // sub) * sub)
    tq = min(tq, _round_up(n, sub))

    def est(t):
        return (2 * 2 * t * inner * itemsize        # double-buffered q + out tiles
                + 2 * n * two_dh * itemsize         # resident kv (2 buffers)
                + heads * t * n * 4                 # f32 sim / p (conservative)
                + 2 * t * inner * 4)                # f32 temporaries

    while tq > sub and est(tq) > _VMEM_TILE_CAP:
        tq = max(sub, ((tq // 2) // sub) * sub)

    kernel = partial(_attn_kernel, heads=heads, dim_head=dim_head,
                     cosine_sim=cosine_sim, scale=scale, causal=causal)
    return pl.pallas_call(
        kernel,
        out_shape=jax.ShapeDtypeStruct((b, n, inner), q.dtype),
        grid=(b, pl.cdiv(n, tq)),
        in_specs=[
            pl.BlockSpec((1, tq, inner), lambda bi, qi: (bi, qi, 0)),
            pl.BlockSpec((1, n, two_dh), lambda bi, qi: (bi, 0, 0)),
            pl.BlockSpec((2, dim_head), lambda bi, qi: (0, 0)),
        ],
        out_specs=pl.BlockSpec((1, tq, inner), lambda bi, qi: (bi, qi, 0)),
        compiler_params=pltpu.CompilerParams(
            dimension_semantics=("parallel", "parallel"),
            vmem_limit_bytes=_vmem_limit(est(tq)),
        ),
    )(q, kv, null_kv)


# --------------------- Kernel 3: to_out linear + output LayerNorm -------------
def _linear_ln_kernel(x_ref, w_ref, g_ref, o_ref, *, eps, stable):
    y = jnp.dot(x_ref[...], w_ref[...], preferred_element_type=jnp.float32)
    if stable:
        y = y / jnp.max(y, axis=-1, keepdims=True)
    mean = jnp.mean(y, axis=-1, keepdims=True)
    yc = y - mean
    var = jnp.mean(yc * yc, axis=-1, keepdims=True)
    o_ref[...] = (yc * lax.rsqrt(var + eps)
                  * g_ref[...].astype(jnp.float32)).astype(o_ref.dtype)


def linear_ln(x2d, w, g, *, eps, stable=False, row_tile=512):
    rows, k_dim = x2d.shape
    n_dim = w.shape[1]
    itemsize = x2d.dtype.itemsize
    wsize = w.dtype.itemsize
    sub = _sublane(x2d.dtype)

    tm = max(sub, (row_tile // sub) * sub)
    tm = min(tm, _round_up(rows, sub))

    def est(t):
        return (2 * t * (k_dim + n_dim) * itemsize
                + 2 * k_dim * n_dim * wsize
                + 2 * t * n_dim * 4)

    while tm > sub and est(tm) > _VMEM_TILE_CAP:
        tm = max(sub, ((tm // 2) // sub) * sub)

    kernel = partial(_linear_ln_kernel, eps=eps, stable=stable)
    return pl.pallas_call(
        kernel,
        out_shape=jax.ShapeDtypeStruct((rows, n_dim), x2d.dtype),
        grid=(pl.cdiv(rows, tm),),
        in_specs=[
            pl.BlockSpec((tm, k_dim), lambda i: (i, 0)),
            pl.BlockSpec((k_dim, n_dim), lambda i: (0, 0)),
            pl.BlockSpec((1, n_dim), lambda i: (0, 0)),
        ],
        out_specs=pl.BlockSpec((tm, n_dim), lambda i: (i, 0)),
        compiler_params=pltpu.CompilerParams(
            dimension_semantics=("parallel",),
            vmem_limit_bytes=_vmem_limit(est(tm)),
        ),
    )(x2d, w, g.reshape(1, n_dim))


# ------------------------------- Full forward ---------------------------------
def attention_forward(x, params, *, heads, dim_head,
                      cosine_sim=True, cosine_sim_scale=16, causal=False):
    b, n, dim = x.shape
    inner = heads * dim_head
    scale = cosine_sim_scale if cosine_sim else dim_head ** (-0.5)
    eps = 1e-5 if x.dtype == jnp.float32 else 1e-3

    # LayerNorm fused with to_q / to_kv projections (one pass over x).
    q2d, kv2d = ln_qkv_proj(x.reshape(b * n, dim), params["norm_g"],
                            params["w_q"], params["w_kv"], eps=eps)
    q = q2d.reshape(b, n, inner)             # (b, n, h*d)  -- no transpose needed
    kv = kv2d.reshape(b, n, 2 * dim_head)    # (b, n, 2*d)

    # TODO(synk): rotary_emb is None in this configuration (not applied).
    out = attention_core(q, kv, params["null_kv"], heads=heads,
                         dim_head=dim_head, cosine_sim=cosine_sim, scale=scale,
                         causal=causal)      # (b, n, h*d)  -- no transpose needed

    # TODO(synk): mask / attn_bias / dropout (p=0.0) are not exercised here.
    y2d = linear_ln(out.reshape(b * n, inner), params["w_out"],
                    params["out_norm_g"], eps=eps)
    return y2d.reshape(b, n, dim)


# ----------------------------- Pure-JAX reference ------------------------------
def _reference_attention(x, params, *, heads, dim_head,
                         cosine_sim=True, cosine_sim_scale=16, causal=False):
    prec = lax.Precision.HIGHEST
    b, n, dim = x.shape
    scale = cosine_sim_scale if cosine_sim else dim_head ** (-0.5)

    def ln(t, g):
        eps = 1e-5 if t.dtype == jnp.float32 else 1e-3
        tf = t.astype(jnp.float32)
        mean = jnp.mean(tf, -1, keepdims=True)
        var = jnp.mean((tf - mean) ** 2, -1, keepdims=True)
        return ((tf - mean) * lax.rsqrt(var + eps) * g.astype(jnp.float32)).astype(t.dtype)

    xn = ln(x, params["norm_g"])
    q = jnp.dot(xn, params["w_q"], precision=prec)
    kv = jnp.dot(xn, params["w_kv"], precision=prec)
    k, v = jnp.split(kv, 2, axis=-1)

    q = q.reshape(b, n, heads, dim_head).transpose(0, 2, 1, 3) * scale
    nk = jnp.broadcast_to(params["null_kv"][0], (b, 1, dim_head))
    nv = jnp.broadcast_to(params["null_kv"][1], (b, 1, dim_head))
    k = jnp.concatenate([nk, k], axis=1)
    v = jnp.concatenate([nv, v], axis=1)

    if cosine_sim:
        def l2n(t):
            return t / jnp.maximum(jnp.linalg.norm(t, axis=-1, keepdims=True), 1e-12)
        q, k = l2n(q), l2n(k)
    q = q * math.sqrt(scale)
    k = k * math.sqrt(scale)

    sim = jnp.einsum("bhid,bjd->bhij", q, k, precision=prec)
    if causal:
        i, j = sim.shape[-2], sim.shape[-1]
        row = jnp.arange(i)[:, None]
        col = jnp.arange(j)[None, :]
        sim = jnp.where(col > row + (j - i), -jnp.finfo(sim.dtype).max, sim)
    attn = jax.nn.softmax(sim.astype(jnp.float32), axis=-1).astype(sim.dtype)
    out = jnp.einsum("bhij,bjd->bhid", attn, v, precision=prec)
    out = out.transpose(0, 2, 1, 3).reshape(b, n, heads * dim_head)
    out = jnp.dot(out, params["w_out"], precision=prec)
    return ln(out, params["out_norm_g"])


if __name__ == "__main__":
    batch, seq, dim = 2, 8, 32
    heads, dim_head = 2, 16           # inner_dim = 32

    key = jax.random.PRNGKey(0)
    kx, kq, kkv, ko, knull = jax.random.split(key, 5)
    x = jax.random.normal(kx, (batch, seq, dim), dtype=jnp.float32)

    params = {
        "norm_g": jnp.ones((dim,), jnp.float32),                       # LayerNorm g
        "w_q": jax.random.normal(kq, (dim, heads * dim_head), jnp.float32) / math.sqrt(dim),
        "w_kv": jax.random.normal(kkv, (dim, 2 * dim_head), jnp.float32) / math.sqrt(dim),
        "w_out": jax.random.normal(ko, (heads * dim_head, dim), jnp.float32) / math.sqrt(heads * dim_head),
        "null_kv": jax.random.normal(knull, (2, dim_head), jnp.float32),
        "out_norm_g": jnp.ones((dim,), jnp.float32),                   # to_out LayerNorm g
    }

    out = attention_forward(x, params, heads=heads, dim_head=dim_head,
                            cosine_sim=True, cosine_sim_scale=16, causal=False)
    out = jax.block_until_ready(out)

    ref = _reference_attention(x, params, heads=heads, dim_head=dim_head,
                               cosine_sim=True, cosine_sim_scale=16, causal=False)
    assert out.shape == x.shape
    assert bool(jnp.all(jnp.isfinite(out))), "non-finite output"
    # Tolerance absorbs MXU f32-matmul precision + approx-reciprocal differences.
    assert jnp.allclose(out, ref, atol=2e-2, rtol=2e-2), "mismatch vs reference"

    print("KERNEL_OK")
</pallas_src>

<mosaic_0001>
module attributes {stable_mosaic.version = 11 : i64} {
  func.func @_ln_qkv_kernel(%arg0: i32, %arg1: memref<16x32xf32, #tpu.memory_space<vmem>>, %arg2: memref<1x32xf32, #tpu.memory_space<vmem>>, %arg3: memref<32x32xf32, #tpu.memory_space<vmem>>, %arg4: memref<32x32xf32, #tpu.memory_space<vmem>>, %arg5: memref<16x32xf32, #tpu.memory_space<vmem>>, %arg6: memref<16x32xf32, #tpu.memory_space<vmem>>) attributes {dimension_semantics = [#tpu.dimension_semantics<parallel>], iteration_bounds = array<i64: 1>, scalar_prefetch = 0 : i64, scratch_operands = 0 : i64, tpu.core_type = #tpu.core_type<tc>, window_params = [{transform_indices = @transform_0, window_bounds = array<i64: 16, 32>}, {pipeline_mode = #tpu.pipeline_mode<synchronous>, transform_indices = @transform_1, window_bounds = array<i64: 1, 32>}, {pipeline_mode = #tpu.pipeline_mode<synchronous>, transform_indices = @transform_2, window_bounds = array<i64: 32, 32>}, {pipeline_mode = #tpu.pipeline_mode<synchronous>, transform_indices = @transform_3, window_bounds = array<i64: 32, 32>}, {transform_indices = @transform_4, window_bounds = array<i64: 16, 32>}, {transform_indices = @transform_5, window_bounds = array<i64: 16, 32>}]} {
    %c0 = arith.constant 0 : index
    %c0_0 = arith.constant 0 : index
    %0 = vector.load %arg1[%c0, %c0_0] : memref<16x32xf32, #tpu.memory_space<vmem>>, vector<16x32xf32>
    %cst = arith.constant dense<0.000000e+00> : vector<16xf32>
    %1 = vector.multi_reduction <add>, %0, %cst [1] : vector<16x32xf32> to vector<16xf32>
    %2 = vector.shape_cast %1 : vector<16xf32> to vector<16x1xf32>
    %cst_1 = arith.constant 3.200000e+01 : f32
    %3 = vector.broadcast %cst_1 : f32 to vector<16x1xf32>
    %4 = arith.divf %2, %3 : vector<16x1xf32>
    %5 = vector.broadcast %4 : vector<16x1xf32> to vector<16x32xf32>
    %6 = arith.subf %0, %5 : vector<16x32xf32>
    %7 = arith.mulf %6, %6 : vector<16x32xf32>
    %cst_2 = arith.constant dense<0.000000e+00> : vector<16xf32>
    %8 = vector.multi_reduction <add>, %7, %cst_2 [1] : vector<16x32xf32> to vector<16xf32>
    %9 = vector.shape_cast %8 : vector<16xf32> to vector<16x1xf32>
    %cst_3 = arith.constant 3.200000e+01 : f32
    %10 = vector.broadcast %cst_3 : f32 to vector<16x1xf32>
    %11 = arith.divf %9, %10 : vector<16x1xf32>
    %cst_4 = arith.constant 9.99999974E-6 : f32
    %12 = vector.broadcast %cst_4 : f32 to vector<16x1xf32>
    %13 = arith.addf %11, %12 : vector<16x1xf32>
    %14 = math.rsqrt %13 : vector<16x1xf32>
    %15 = vector.broadcast %14 : vector<16x1xf32> to vector<16x32xf32>
    %16 = arith.mulf %6, %15 : vector<16x32xf32>
    %c0_5 = arith.constant 0 : index
    %c0_6 = arith.constant 0 : index
    %17 = vector.load %arg2[%c0_5, %c0_6] : memref<1x32xf32, #tpu.memory_space<vmem>>, vector<1x32xf32>
    %18 = vector.broadcast %17 : vector<1x32xf32> to vector<16x32xf32>
    %19 = arith.mulf %16, %18 : vector<16x32xf32>
    %c0_7 = arith.constant 0 : index
    %c0_8 = arith.constant 0 : index
    %20 = vector.load %arg3[%c0_7, %c0_8] : memref<32x32xf32, #tpu.memory_space<vmem>>, vector<32x32xf32>
    %cst_9 = arith.constant dense<0.000000e+00> : vector<16x32xf32>
    %21 = tpu.matmul %19, %20, %cst_9 {dimension_numbers = #tpu.dot_dimension_numbers<[1], [0], [0], [1], [0, 0, 1, 1], [], []>} : vector<16x32xf32>, vector<32x32xf32>, vector<16x32xf32> -> vector<16x32xf32>
    %c0_10 = arith.constant 0 : index
    %c0_11 = arith.constant 0 : index
    %22 = vector.load %arg5[%c0_10, %c0_11] : memref<16x32xf32, #tpu.memory_space<vmem>>, vector<16x32xf32>
    tpu.vector_store %arg5[%c0_10, %c0_11], %21 {strides = array<i32>} : memref<16x32xf32, #tpu.memory_space<vmem>>, vector<16x32xf32>,
    %c0_12 = arith.constant 0 : index
    %c0_13 = arith.constant 0 : index
    %23 = vector.load %arg4[%c0_12, %c0_13] : memref<32x32xf32, #tpu.memory_space<vmem>>, vector<32x32xf32>
    %cst_14 = arith.constant dense<0.000000e+00> : vector<16x32xf32>
    %24 = tpu.matmul %19, %23, %cst_14 {dimension_numbers = #tpu.dot_dimension_numbers<[1], [0], [0], [1], [0, 0, 1, 1], [], []>} : vector<16x32xf32>, vector<32x32xf32>, vector<16x32xf32> -> vector<16x32xf32>
    %c0_15 = arith.constant 0 : index
    %c0_16 = arith.constant 0 : index
    %25 = vector.load %arg6[%c0_15, %c0_16] : memref<16x32xf32, #tpu.memory_space<vmem>>, vector<16x32xf32>
    tpu.vector_store %arg6[%c0_15, %c0_16], %24 {strides = array<i32>} : memref<16x32xf32, #tpu.memory_space<vmem>>, vector<16x32xf32>,
    return
  }
  func.func @transform_0(%arg0: i32) -> (i32, i32) {
    %c0_i32 = arith.constant 0 : i32
    %c0_i32_0 = arith.constant 0 : i32
    return %arg0, %c0_i32 : i32, i32
  }
  func.func @transform_1(%arg0: i32) -> (i32, i32) {
    %c0_i32 = arith.constant 0 : i32
    %c0_i32_0 = arith.constant 0 : i32
    %c0_i32_1 = arith.constant 0 : i32
    return %c0_i32, %c0_i32_0 : i32, i32
  }
  func.func @transform_2(%arg0: i32) -> (i32, i32) {
    %c0_i32 = arith.constant 0 : i32
    %c0_i32_0 = arith.constant 0 : i32
    %c0_i32_1 = arith.constant 0 : i32
    return %c0_i32, %c0_i32_0 : i32, i32
  }
  func.func @transform_3(%arg0: i32) -> (i32, i32) {
    %c0_i32 = arith.constant 0 : i32
    %c0_i32_0 = arith.constant 0 : i32
    %c0_i32_1 = arith.constant 0 : i32
    return %c0_i32, %c0_i32_0 : i32, i32
  }
  func.func @transform_4(%arg0: i32) -> (i32, i32) {
    %c0_i32 = arith.constant 0 : i32
    %c0_i32_0 = arith.constant 0 : i32
    return %arg0, %c0_i32 : i32, i32
  }
  func.func @transform_5(%arg0: i32) -> (i32, i32) {
    %c0_i32 = arith.constant 0 : i32
    %c0_i32_0 = arith.constant 0 : i32
    return %arg0, %c0_i32 : i32, i32
  }
}

</mosaic_0001>

<llo_original>
// kernel: tpu_custom_call.1
$region0: #{tpu_custom_call.1}
  #allocation0 [shape = 'u32[]', space=smem, size = 0x4, offset = 0x4, fixed_abs, tag = 'smem constant byte address 0x4 - core index']
  #allocation1 [shape = 'u32[144,128]{1,0:T(1,128)}', space=vmem, size = 0x12000, scoped, tag = 'internal scratch']
  %s0 = inlined_call_operand.hbm [shape: f32[16,32], index: 0, kind: input, shape index: {}]
  %s1 = inlined_call_operand.vmem [shape: f32[1,32], index: 1, kind: input, shape index: {}]
  %s2 = inlined_call_operand.hbm [shape: f32[32,32], index: 2, kind: input, shape index: {}]
  %s3 = inlined_call_operand.hbm [shape: f32[32,32], index: 3, kind: input, shape index: {}]
  %s4 = inlined_call_operand.hbm [shape: f32[16,32], index: 4, kind: output, shape index: {0}]
  %s5 = inlined_call_operand.hbm [shape: f32[16,32], index: 5, kind: output, shape index: {1}]
  %6 = xla_tuple %s4, %s5
  %s7 = sld [smem:[#allocation0]]
  $region46: #{tpu_custom_call.1} parent=0
    _
  %s9 = ssub.s32 1, %s7
  %s10 = scalar_select 0, %s9, %s7
  $region1: #{tpu_custom_call.1} parent=0
    #allocation2 [shape = 'u8[8192]{0}', space=vmem, size = 0x2000, scoped, tag = 'input window, operand 0, single buffered']
    #allocation3 [shape = 's32[1]{0}', space=sflag, size = 0x4, scoped, tag = 'scoped memory for tpu_custom_call.1']
    #allocation4 [shape = 's32[1]{0}', space=sflag, size = 0x4, scoped, tag = 'scoped memory for tpu_custom_call.1']
    #allocation5 [shape = 'u8[16384]{0}', space=vmem, size = 0x4000, scoped, tag = 'input window, operand 2, single buffered']
    #allocation6 [shape = 's32[1]{0}', space=sflag, size = 0x4, scoped, tag = 'scoped memory for tpu_custom_call.1']
    #allocation7 [shape = 'u8[16384]{0}', space=vmem, size = 0x4000, scoped, tag = 'input window, operand 3, single buffered']
    #allocation8 [shape = 'u8[8192]{0}', space=vmem, size = 0x2000, scoped, tag = 'output window, operand 0, single buffered']
    #allocation9 [shape = 'u8[8192]{0}', space=vmem, size = 0x2000, scoped, tag = 'output window, operand 1, single buffered']
    #allocation10 [shape = 's32[1]{0}', space=sflag, size = 0x4, scoped, tag = 'scoped memory for tpu_custom_call.1']
    %11 = vsyncpa [#allocation3], 0
    %12 = vsyncpa [#allocation6], 0
    %13 = vsyncpa [#allocation4], 0
    %14 = vsyncpa [#allocation10], 0
    // Predicated region
    $region2: #{tpu_custom_call.1} parent=1 // pred_check
      _
    $region3: #{tpu_custom_call.1} parent=1 // pred_check_branch
      %16 = sbr.rel (0) target = $region5
    $region4: #{tpu_custom_call.1} parent=1 // pred_region
      %s18 = ssub.s32 256, 256
      %19 = vsyncadd [#allocation3], %s18
      %s20 = sshll.u32 [#allocation2], 4
      %s21 = int_to_ptr.vmem [resolvable:$true] %s20
      %26 = dma.hbm_to_vmem [thread:$0]  %s0, 256, %s21, [#allocation3], 128, 128, 8
    $region5: #{tpu_custom_call.1} parent=1 // pred_fallthru
      _
    // Predicated region
    $region6: #{tpu_custom_call.1} parent=1 // pred_check
      _
    $region7: #{tpu_custom_call.1} parent=1 // pred_check_branch
      %28 = sbr.rel (0) target = $region9
    $region8: #{tpu_custom_call.1} parent=1 // pred_region
      _
    $region9: #{tpu_custom_call.1} parent=1 // pred_fallthru
      _
    // Predicated region
    $region10: #{tpu_custom_call.1} parent=1 // pred_check
      _
    $region11: #{tpu_custom_call.1} parent=1 // pred_check_branch
      %30 = sbr.rel (0) target = $region13
    $region12: #{tpu_custom_call.1} parent=1 // pred_region
      %s32 = ssub.s32 512, 512
      %33 = vsyncadd [#allocation6], %s32
      %s34 = sshll.u32 [#allocation5], 4
      %s35 = int_to_ptr.vmem [resolvable:$true] %s34
      %40 = dma.hbm_to_vmem [thread:$0]  %s2, 512, %s35, [#allocation6], 128, 128, 8
    $region13: #{tpu_custom_call.1} parent=1 // pred_fallthru
      _
    // Predicated region
    $region14: #{tpu_custom_call.1} parent=1 // pred_check
      _
    $region15: #{tpu_custom_call.1} parent=1 // pred_check_branch
      %42 = sbr.rel (0) target = $region17
    $region16: #{tpu_custom_call.1} parent=1 // pred_region
      %s44 = ssub.s32 512, 512
      %45 = vsyncadd [#allocation6], %s44
      %s46 = sshll.u32 [#allocation7], 4
      %s47 = int_to_ptr.vmem [resolvable:$true] %s46
      %52 = dma.hbm_to_vmem [thread:$0]  %s3, 512, %s47, [#allocation6], 128, 128, 8
    $region17: #{tpu_custom_call.1} parent=1 // pred_fallthru
      _
    // Predicated region
    $region18: #{tpu_custom_call.1} parent=1 // pred_check
      _
    $region19: #{tpu_custom_call.1} parent=1 // pred_check_branch
      %54 = sbr.rel (0) target = $region21
    $region20: #{tpu_custom_call.1} parent=1 // pred_region
      %55 = dma.done [#allocation3], 256
    $region21: #{tpu_custom_call.1} parent=1 // pred_fallthru
      _
    // Predicated region
    $region22: #{tpu_custom_call.1} parent=1 // pred_check
      _
    $region23: #{tpu_custom_call.1} parent=1 // pred_check_branch
      %57 = sbr.rel (0) target = $region25
    $region24: #{tpu_custom_call.1} parent=1 // pred_region
      %58 = dma.done [#allocation6], 512
    $region25: #{tpu_custom_call.1} parent=1 // pred_fallthru
      _
    // Predicated region
    $region26: #{tpu_custom_call.1} parent=1 // pred_check
      _
    $region27: #{tpu_custom_call.1} parent=1 // pred_check_branch
      %60 = sbr.rel (0) target = $region29
    $region28: #{tpu_custom_call.1} parent=1 // pred_region
      %61 = dma.done [#allocation6], 512
    $region29: #{tpu_custom_call.1} parent=1 // pred_fallthru
      _
    %v62 = vld [vmem:[#allocation2] sm:$0xff]
    %v63 = vld [vmem:[#allocation2 + $0x8] sm:$0xff]
    %vm64 = vcmask 261120
    %v65 = vsel %vm64, %v62, 0.0
    %66 = vadd.xlane.f32.xlu0 %v65
    %v67 = vpop.xlane.xlu0 %66
    %v68 = vsel %vm64, %v63, 0.0
    %69 = vadd.xlane.f32.xlu0 %v68
    %v70 = vpop.xlane.xlu0 %69
    %v71 = vrcp.pop 32.0
    %v72 = vmul.f32 %v67, %v71
    %v73 = vmul.f32 %v70, %v71
    %v74 = vsub.f32 %v62, %v72
    %v75 = vsub.f32 %v63, %v73
    %v76 = vmul.f32 %v74, %v74
    %v77 = vmul.f32 %v75, %v75
    %v78 = vsel %vm64, %v76, 0.0
    %79 = vadd.xlane.f32.xlu0 %v78
    %v80 = vpop.xlane.xlu0 %79
    %v81 = vsel %vm64, %v77, 0.0
    %82 = vadd.xlane.f32.xlu0 %v81
    %v83 = vpop.xlane.xlu0 %82
    %v84 = vmul.f32 %v80, %v71
    %v85 = vmul.f32 %v83, %v71
    %v86 = vadd.f32 %v84, 1e-05
    %v87 = vadd.f32 %v85, 1e-05
    %v88 = vrsqrt.pop %v86
    %v89 = vrsqrt.pop %v87
    %v90 = vmul.f32 %v74, %v88
    %v91 = vmul.f32 %v75, %v89
    %v92 = vld [vmem:[%s1] sm:$0x1]
    %v94 = vlaneseq
    %v95 = vshrl.u32 %v94, 7
    %v96 = vsub.s32 0, %v95
    %v97 = vrot.slane %v92, %v96
    %v99 = vmul.f32 %v90, %v97
    %v100 = vmul.f32 %v91, %v97
    %v101 = vld [vmem:[#allocation5] sm:$0xff]
    %v102 = vld [vmem:[#allocation5 + $0x8] sm:$0xff]
    %v103 = vld [vmem:[#allocation5 + $0x10] sm:$0xff]
    %v104 = vld [vmem:[#allocation5 + $0x18] sm:$0xff]
    %v106 = vsel %vm64, %v99, 0
    %v109 = vsel %vm64, %v100, 0
    %111 = vmatprep.subr.mxu0 0.0
    %112 = vmatpush1.msra.mxu0 %v101
    %113 = vmatprep.subr.mxu0 0.0
    %114 = vmatpush1.msra.mxu0 %v102
    %115 = vmatprep.subr.mxu0 0.0
    %116 = vmatpush1.msra.mxu0 %v103
    %117 = vmatprep.subr.mxu0 0.0
    %118 = vmatpush1.msra.mxu0 %v104
    %119 = vmatprep.subr.mxu0 0.0
    %120 = vmatpush1.msra.mxu0 0.0
    %121 = vmatprep.subr.mxu0 0.0
    %122 = vmatpush1.msra.mxu0 0.0
    %123 = vmatprep.subr.mxu0 0.0
    %124 = vmatpush1.msra.mxu0 0.0
    %125 = vmatprep.subr.mxu0 0.0
    %126 = vmatpush1.msra.mxu0 0.0
    %127 = vmatprep.subr.mxu0 0.0
    %128 = vmatpush1.msra.mxu0 0.0
    %129 = vmatprep.subr.mxu0 0.0
    %130 = vmatpush1.msra.mxu0 0.0
    %131 = vmatprep.subr.mxu0 0.0
    %132 = vmatpush1.msra.mxu0 0.0
    %133 = vmatprep.subr.mxu0 0.0
    %134 = vmatpush1.msra.mxu0 0.0
    %135 = vmatprep.subr.mxu0 0.0
    %136 = vmatpush1.msra.mxu0 0.0
    %137 = vmatprep.subr.mxu0 0.0
    %138 = vmatpush1.msra.mxu0 0.0
    %139 = vmatprep.subr.mxu0 0.0
    %140 = vmatpush1.msra.mxu0 0.0
    %141 = vmatprep.subr.mxu0 0.0
    %142 = vmatpush1.msra.mxu0 0.0
    %143 = vmatprep.subr.mxu0 0.0
    %144 = vmatpush1.msra.mxu0 0.0
    %145 = vmatprep.subr.mxu0 0.0
    %146 = vmatpush1.msra.mxu0 0.0
    %147 = vmatprep.subr.mxu0 0.0
    %148 = vmatpush1.msra.mxu0 0.0
    %149 = vmatprep.subr.mxu0 0.0
    %150 = vmatpush1.msra.mxu0 0.0
    %151 = vmatprep.subr.mxu0 0.0
    %152 = vmatpush1.msra.mxu0 0.0
    %153 = vmatprep.subr.mxu0 0.0
    %154 = vmatpush1.msra.mxu0 0.0
    %155 = vmatprep.subr.mxu0 0.0
    %156 = vmatpush1.msra.mxu0 0.0
    %157 = vmatprep.subr.mxu0 0.0
    %158 = vmatpush1.msra.mxu0 0.0
    %159 = vmatprep.subr.mxu0 0.0
    %160 = vmatpush1.msra.mxu0 0.0
    %161 = vmatprep.subr.mxu0 0.0
    %162 = vmatpush1.msra.mxu0 0.0
    %163 = vmatprep.subr.mxu0 0.0
    %164 = vmatpush1.msra.mxu0 0.0
    %165 = vmatprep.subr.mxu0 0.0
    %166 = vmatpush1.msra.mxu0 0.0
    %167 = vmatprep.subr.mxu0 0.0
    %168 = vmatpush1.msra.mxu0 0.0
    %169 = vmatprep.subr.mxu0 0.0
    %170 = vmatpush1.msra.mxu0 0.0
    %171 = vmatprep.subr.mxu0 0.0
    %172 = vmatpush1.msra.mxu0 0.0
    %173 = vmatprep.subr.mxu0 0.0
    %174 = vmatpush1.msra.mxu0 0.0
    %175 = vmatprep.mubr.f32.mxu0 0.0
    %176 = vmatmul.mubr.f32.gmra.mrb[0].mxu0 %v106
    %v177 = vpop.f32.mrb[0].mxu0
    %v178 = vadd.f32 0.0, %v177
    %v179 = vpop.f32.mrb[0].mxu0
    %180 = vmatprep.mubr.f32.mxu0 0.0
    %181 = vmatmul.mubr.f32.gmra.mrb[0].mxu0 %v109
    %v182 = vpop.f32.mrb[0].mxu0
    %v183 = vadd.f32 0.0, %v182
    %v184 = vpop.f32.mrb[0].mxu0
    %185 = vdwg.mxu0
    %186 = vst.msk [vmem:[#allocation8] sm:$0xff] %vm64, %v178
    %187 = vst.msk [vmem:[#allocation8 + $0x8] sm:$0xff] %vm64, %v183
    %v188 = vld [vmem:[#allocation7] sm:$0xff]
    %v189 = vld [vmem:[#allocation7 + $0x8] sm:$0xff]
    %v190 = vld [vmem:[#allocation7 + $0x10] sm:$0xff]
    %v191 = vld [vmem:[#allocation7 + $0x18] sm:$0xff]
    %192 = vmatprep.subr.mxu0 0.0
    %193 = vmatpush1.msra.mxu0 %v188
    %194 = vmatprep.subr.mxu0 0.0
    %195 = vmatpush1.msra.mxu0 %v189
    %196 = vmatprep.subr.mxu0 0.0
    %197 = vmatpush1.msra.mxu0 %v190
    %198 = vmatprep.subr.mxu0 0.0
    %199 = vmatpush1.msra.mxu0 %v191
    %200 = vmatprep.subr.mxu0 0.0
    %201 = vmatpush1.msra.mxu0 0.0
    %202 = vmatprep.subr.mxu0 0.0
    %203 = vmatpush1.msra.mxu0 0.0
    %204 = vmatprep.subr.mxu0 0.0
    %205 = vmatpush1.msra.mxu0 0.0
    %206 = vmatprep.subr.mxu0 0.0
    %207 = vmatpush1.msra.mxu0 0.0
    %208 = vmatprep.subr.mxu0 0.0
    %209 = vmatpush1.msra.mxu0 0.0
    %210 = vmatprep.subr.mxu0 0.0
    %211 = vmatpush1.msra.mxu0 0.0
    %212 = vmatprep.subr.mxu0 0.0
    %213 = vmatpush1.msra.mxu0 0.0
    %214 = vmatprep.subr.mxu0 0.0
    %215 = vmatpush1.msra.mxu0 0.0
    %216 = vmatprep.subr.mxu0 0.0
    %217 = vmatpush1.msra.mxu0 0.0
    %218 = vmatprep.subr.mxu0 0.0
    %219 = vmatpush1.msra.mxu0 0.0
    %220 = vmatprep.subr.mxu0 0.0
    %221 = vmatpush1.msra.mxu0 0.0
    %222 = vmatprep.subr.mxu0 0.0
    %223 = vmatpush1.msra.mxu0 0.0
    %224 = vmatprep.subr.mxu0 0.0
    %225 = vmatpush1.msra.mxu0 0.0
    %226 = vmatprep.subr.mxu0 0.0
    %227 = vmatpush1.msra.mxu0 0.0
    %228 = vmatprep.subr.mxu0 0.0
    %229 = vmatpush1.msra.mxu0 0.0
    %230 = vmatprep.subr.mxu0 0.0
    %231 = vmatpush1.msra.mxu0 0.0
    %232 = vmatprep.subr.mxu0 0.0
    %233 = vmatpush1.msra.mxu0 0.0
    %234 = vmatprep.subr.mxu0 0.0
    %235 = vmatpush1.msra.mxu0 0.0
    %236 = vmatprep.subr.mxu0 0.0
    %237 = vmatpush1.msra.mxu0 0.0
    %238 = vmatprep.subr.mxu0 0.0
    %239 = vmatpush1.msra.mxu0 0.0
    %240 = vmatprep.subr.mxu0 0.0
    %241 = vmatpush1.msra.mxu0 0.0
    %242 = vmatprep.subr.mxu0 0.0
    %243 = vmatpush1.msra.mxu0 0.0
    %244 = vmatprep.subr.mxu0 0.0
    %245 = vmatpush1.msra.mxu0 0.0
    %246 = vmatprep.subr.mxu0 0.0
    %247 = vmatpush1.msra.mxu0 0.0
    %248 = vmatprep.subr.mxu0 0.0
    %249 = vmatpush1.msra.mxu0 0.0
    %250 = vmatprep.subr.mxu0 0.0
    %251 = vmatpush1.msra.mxu0 0.0
    %252 = vmatprep.subr.mxu0 0.0
    %253 = vmatpush1.msra.mxu0 0.0
    %254 = vmatprep.subr.mxu0 0.0
    %255 = vmatpush1.msra.mxu0 0.0
    %256 = vmatprep.mubr.f32.mxu0 0.0
    %257 = vmatmul.mubr.f32.gmra.mrb[0].mxu0 %v106
    %v258 = vpop.f32.mrb[0].mxu0
    %v259 = vadd.f32 0.0, %v258
    %v260 = vpop.f32.mrb[0].mxu0
    %261 = vmatprep.mubr.f32.mxu0 0.0
    %262 = vmatmul.mubr.f32.gmra.mrb[0].mxu0 %v109
    %v263 = vpop.f32.mrb[0].mxu0
    %v264 = vadd.f32 0.0, %v263
    %v265 = vpop.f32.mrb[0].mxu0
    %266 = vdwg.mxu0
    %267 = vst.msk [vmem:[#allocation9] sm:$0xff] %vm64, %v259
    %268 = vst.msk [vmem:[#allocation9 + $0x8] sm:$0xff] %vm64, %v264
    // Predicated region
    $region30: #{tpu_custom_call.1} parent=1 // pred_check
      _
    $region31: #{tpu_custom_call.1} parent=1 // pred_check_branch
      %270 = sbr.rel (0) target = $region33
    $region32: #{tpu_custom_call.1} parent=1 // pred_region
      %s272 = ssub.s32 256, 256
      %273 = vsyncadd [#allocation4], %s272
      %s274 = sshll.u32 [#allocation8], 4
      %s275 = int_to_ptr.vmem [resolvable:$true] %s274
      %280 = dma.vmem_to_hbm [thread:$0]  %s275, 256, %s4, [#allocation4], 128, 128, 8
    $region33: #{tpu_custom_call.1} parent=1 // pred_fallthru
      _
    // Predicated region
    $region34: #{tpu_custom_call.1} parent=1 // pred_check
      _
    $region35: #{tpu_custom_call.1} parent=1 // pred_check_branch
      %282 = sbr.rel (0) target = $region37
    $region36: #{tpu_custom_call.1} parent=1 // pred_region
      %s284 = ssub.s32 256, 256
      %285 = vsyncadd [#allocation10], %s284
      %s286 = sshll.u32 [#allocation9], 4
      %s287 = int_to_ptr.vmem [resolvable:$true] %s286
      %292 = dma.vmem_to_hbm [thread:$0]  %s287, 256, %s5, [#allocation10], 128, 128, 8
    $region37: #{tpu_custom_call.1} parent=1 // pred_fallthru
      _
    // Predicated region
    $region38: #{tpu_custom_call.1} parent=1 // pred_check
      _
    $region39: #{tpu_custom_call.1} parent=1 // pred_check_branch
      %294 = sbr.rel (0) target = $region41
    $region40: #{tpu_custom_call.1} parent=1 // pred_region
      %295 = dma.done [#allocation4], 256
    $region41: #{tpu_custom_call.1} parent=1 // pred_fallthru
      _
    // Predicated region
    $region42: #{tpu_custom_call.1} parent=1 // pred_check
      _
    $region43: #{tpu_custom_call.1} parent=1 // pred_check_branch
      %297 = sbr.rel (0) target = $region45
    $region44: #{tpu_custom_call.1} parent=1 // pred_region
      %298 = dma.done [#allocation10], 256
    $region45: #{tpu_custom_call.1} parent=1 // pred_fallthru
      _
    %299 = vsyncpa [#allocation3], 1
    %300 = vsyncpa [#allocation6], 1
    %301 = vsyncpa [#allocation4], 1
    %302 = vsyncpa [#allocation10], 1

</llo_original>
